<compile_context>
chip_gen: v5e
topology: v5e:2x2
jax: 0.10.0
libtpu: 0.0.40
codegen_flags: <defaults>
</compile_context>

<pallas_src>
import numpy as np
import jax
import jax.numpy as jnp
from jax.experimental import pallas as pl
from jax.experimental.pallas import tpu as pltpu

# Module hyper-params: CMaxPool2d(kernel_size=2) with the MaxPool2d default
# stride == kernel_size and no padding.
N, C, H, W = 2, 4, 16, 16
KH = KW = 2
SH, SW = KH, KW                          # default stride = kernel_size
OH = (H - KH) // SH + 1
OW = (W - KW) // SW + 1
KK = KH * KW                             # taps per pooling window
LANE = 128


def _cmaxpool_kernel(x_ref, o_ref):
    """x_ref: (KK, R, 128) tap-major slab; o_ref: (R, 128).

    Reduce max over the KK pooling taps with full-vreg elementwise maxima
    (static unroll, KK = 4), then one dense, unmasked store. Load/HBM slot
    is the binding unit; the 3 VALU maxima are free filler.
    """
    acc = x_ref[0]
    for k in range(1, KK):
        acc = jnp.maximum(acc, x_ref[k])
    o_ref[...] = acc


@jax.jit
def cmaxpool2d(x):
    """Complex max-pool. x: (N, C, H, W, 2) -> (N, C, OH, OW, 2), same dtype."""
    dtype = x.dtype

    # Floor behaviour of MaxPool2d: trim any ragged edge, then expose windows.
    xt = x[:, :, :OH * SH, :OW * SW, :]
    xt = xt.reshape(N, C, OH, KH, OW, KW, 2)
    # Taps to the front, everything else (N, C, OH, OW, complex) flattened.
    # Under jit + allow_input_fusion this transpose fuses into the Pallas
    # operand load rather than materializing a separate HBM slab.
    xt = jnp.transpose(xt, (3, 5, 0, 1, 2, 4, 6))      # (KH, KW, N, C, OH, OW, 2)
    m = N * C * OH * OW * 2
    slab = xt.reshape(KK, m)

    # Lane-dense: fold the flat axis into (rows, 128). Pad (max-safe, -inf)
    # if not a multiple of 128 (here m = 1024, so no padding is added).
    m_pad = ((m + LANE - 1) // LANE) * LANE
    if m_pad != m:
        slab = jnp.pad(slab, ((0, 0), (0, m_pad - m)),
                       constant_values=-jnp.inf)
    r = m_pad // LANE
    slab = slab.reshape(KK, r, LANE)

    out = pl.pallas_call(
        _cmaxpool_kernel,
        out_shape=jax.ShapeDtypeStruct((r, LANE), dtype),
        # Gridless: whole arrays resident in VMEM, no pipeline machinery.
        in_specs=[pl.BlockSpec(memory_space=pltpu.MemorySpace.VMEM)],
        out_specs=pl.BlockSpec(memory_space=pltpu.MemorySpace.VMEM),
        compiler_params=pltpu.CompilerParams(allow_input_fusion=[True]),
    )(slab)

    # Undo the wrapper-side flattening (pure reshape; the flatten order was
    # already (N, C, OH, OW, complex), so no transpose is needed).
    out = out.reshape(m_pad)[:m].reshape(N, C, OH, OW, 2)
    return out


def _ref_cmaxpool(xn):
    """Direct numpy reference of the PyTorch CMaxPool2d forward."""
    xr = xn[:, :, :OH * SH, :OW * SW, :].reshape(N, C, OH, KH, OW, KW, 2)
    return xr.max(axis=(3, 5))            # max over the pooling window


if __name__ == "__main__":
    key = jax.random.PRNGKey(0)
    # Input: (N, C, H, W, 2) — real/imag stacked on the last axis.
    x = jax.random.normal(key, (N, C, H, W, 2), dtype=jnp.float32)

    out = jax.block_until_ready(cmaxpool2d(x))
    assert out.shape == (N, C, OH, OW, 2)

    ref = _ref_cmaxpool(np.asarray(x))
    np.testing.assert_allclose(np.asarray(out), ref, rtol=0, atol=0)
    print("KERNEL_OK")
</pallas_src>

<mosaic_0001>
module attributes {stable_mosaic.version = 11 : i64} {
  func.func @_cmaxpool_kernel(%arg0: memref<4x8x128xf32, #tpu.memory_space<vmem>>, %arg1: memref<8x128xf32, #tpu.memory_space<vmem>>) attributes {dimension_semantics = [], scalar_prefetch = 0 : i64, scratch_operands = 0 : i64, tpu.core_type = #tpu.core_type<tc>} {
    %c0 = arith.constant 0 : index
    %c0_0 = arith.constant 0 : index
    %c0_1 = arith.constant 0 : index
    %0 = vector.load %arg0[%c0, %c0_0, %c0_1] : memref<4x8x128xf32, #tpu.memory_space<vmem>>, vector<1x8x128xf32>
    %1 = vector.shape_cast %0 : vector<1x8x128xf32> to vector<8x128xf32>
    %c1 = arith.constant 1 : index
    %c0_2 = arith.constant 0 : index
    %c0_3 = arith.constant 0 : index
    %2 = vector.load %arg0[%c1, %c0_2, %c0_3] : memref<4x8x128xf32, #tpu.memory_space<vmem>>, vector<1x8x128xf32>
    %3 = vector.shape_cast %2 : vector<1x8x128xf32> to vector<8x128xf32>
    %4 = arith.maximumf %1, %3 : vector<8x128xf32>
    %c2 = arith.constant 2 : index
    %c0_4 = arith.constant 0 : index
    %c0_5 = arith.constant 0 : index
    %5 = vector.load %arg0[%c2, %c0_4, %c0_5] : memref<4x8x128xf32, #tpu.memory_space<vmem>>, vector<1x8x128xf32>
    %6 = vector.shape_cast %5 : vector<1x8x128xf32> to vector<8x128xf32>
    %7 = arith.maximumf %4, %6 : vector<8x128xf32>
    %c3 = arith.constant 3 : index
    %c0_6 = arith.constant 0 : index
    %c0_7 = arith.constant 0 : index
    %8 = vector.load %arg0[%c3, %c0_6, %c0_7] : memref<4x8x128xf32, #tpu.memory_space<vmem>>, vector<1x8x128xf32>
    %9 = vector.shape_cast %8 : vector<1x8x128xf32> to vector<8x128xf32>
    %10 = arith.maximumf %7, %9 : vector<8x128xf32>
    %c0_8 = arith.constant 0 : index
    %c0_9 = arith.constant 0 : index
    %11 = vector.load %arg1[%c0_8, %c0_9] : memref<8x128xf32, #tpu.memory_space<vmem>>, vector<8x128xf32>
    tpu.vector_store %arg1[%c0_8, %c0_9], %10 {strides = array<i32>} : memref<8x128xf32, #tpu.memory_space<vmem>>, vector<8x128xf32>,
    return
  }
}

</mosaic_0001>

<llo_original>
// kernel: cmaxpool2d.1
$region0: #{cmaxpool2d.1}
  #allocation0 [shape = 'u32[]', space=smem, size = 0x4, offset = 0x4, fixed_abs, tag = 'smem constant byte address 0x4 - core index']
  #allocation1 [shape = 'u32[72,128]{1,0:T(1,128)}', space=vmem, size = 0x9000, scoped, tag = 'internal scratch']
  %s0 = inlined_call_operand.vmem [shape: f32[4,8,128], index: 0, kind: input, shape index: {}]
  %s1 = inlined_call_operand.vmem [shape: f32[8,128], index: 1, kind: output, shape index: {}]
  %s2 = sld [smem:[#allocation0]]
  $region14: #{cmaxpool2d.1} parent=0
    _
  %s4 = ssub.s32 1, %s2
  %s5 = scalar_select 0, %s4, %s2
  // Predicated region
  $region2: #{cmaxpool2d.1} parent=0 // pred_check
    _
  $region3: #{cmaxpool2d.1} parent=0 // pred_check_branch
    %7 = sbr.rel (0) target = $region5
  $region4: #{cmaxpool2d.1} parent=0 // pred_region
    _
  $region5: #{cmaxpool2d.1} parent=0 // pred_fallthru
    _
  %v8 = vld [vmem:[%s0] sm:$0xff]
  %s9 = scalar_lea.vmem %s0, 8
  %v10 = vld [vmem:[%s9] sm:$0xff]
  %v11 = vmax.f32 %v8, %v10
  %s12 = scalar_lea.vmem %s0, 16
  %v13 = vld [vmem:[%s12] sm:$0xff]
  %v14 = vmax.f32 %v11, %v13
  %s15 = scalar_lea.vmem %s0, 24
  %v16 = vld [vmem:[%s15] sm:$0xff]
  %v17 = vmax.f32 %v14, %v16
  %18 = vst [vmem:[%s1] sm:$0xff] %v17
  // Predicated region
  $region6: #{cmaxpool2d.1} parent=0 // pred_check
    _
  $region7: #{cmaxpool2d.1} parent=0 // pred_check_branch
    %20 = sbr.rel (0) target = $region9
  $region8: #{cmaxpool2d.1} parent=0 // pred_region
    _
  $region9: #{cmaxpool2d.1} parent=0 // pred_fallthru
    _
  // Predicated region
  $region10: #{cmaxpool2d.1} parent=0 // pred_check
    _
  $region11: #{cmaxpool2d.1} parent=0 // pred_check_branch
    %22 = sbr.rel (0) target = $region13
  $region12: #{cmaxpool2d.1} parent=0 // pred_region
    _
  $region13: #{cmaxpool2d.1} parent=0 // pred_fallthru
    _

</llo_original>
